<compile_context>
chip_gen: v5e
topology: v5e:2x2
jax: 0.10.0
libtpu: 0.0.40
codegen_flags: <defaults>
</compile_context>

<pallas_src>
import numpy as np
import jax
import jax.numpy as jnp
from jax.experimental import pallas as pl
from jax.experimental.pallas import tpu as pltpu


# ----------------------------------------------------------------------------
# Pallas kernel: fused (CFG drop -> Linear(bf16 MXU, f32 acc) -> SiLU), one tile
# ----------------------------------------------------------------------------
def _text_embed_stem_kernel(x_ref, keep_ref, null_ref, w_ref, b_ref, out_ref):
    # x_ref    : (Bp, D_in)     pooled text embeddings (padded to 8-row sublane group)
    # keep_ref : (Bp, 1)  f32   1.0 = keep conditioning, 0.0 = replace with null embed
    # null_ref : (1, D_in)      learned null text embedding
    # w_ref    : (D_in, D_out)  stem Linear weight, stored bf16, input-major (= torch W.T)
    # b_ref    : (1, D_out)     stem Linear bias
    # out_ref  : (Bp, D_out)

    # classifier-free-guidance conditioning dropout, done directly in bf16
    # (select needs no extra precision; avoids an f32 round-trip of the (Bp, D_in) tile)
    x = x_ref[...].astype(jnp.bfloat16)                       # (Bp, D_in)
    null = null_ref[...].astype(jnp.bfloat16)                 # (1, D_in)
    keep = keep_ref[...] > 0.5                                # (Bp, 1) bool
    x = jnp.where(keep, x, null)                              # (Bp, D_in) bf16

    # Linear: bf16 operands into the MXU, f32 accumulation, f32 bias add
    y = jnp.dot(x, w_ref[...], preferred_element_type=jnp.float32)   # (Bp, D_out) f32
    y = y + b_ref[...].astype(jnp.float32)

    # SiLU in f32 (sigmoid/exp run on the EUP slot)
    y = y * jax.nn.sigmoid(y)

    out_ref[...] = y.astype(out_ref.dtype)


def text_embed_stem_pallas(text_embeds, keep_mask, null_embed, w_bf16, b):
    """text_embeds: (B, D_in); keep_mask: (B, 1) bool; null_embed: (D_in,);
    w_bf16: (D_in, D_out) bf16 (transpose of torch Linear.weight); b: (D_out,).
    Returns (B, 1, D_out) = SiLU(where(keep, x, null) @ w + b).unsqueeze(1)."""
    B, d_in = text_embeds.shape
    d_out = w_bf16.shape[1]
    out_dtype = text_embeds.dtype

    # pad batch up to a full sublane group (8 rows) -> unmasked stores, denser MXU rows
    Bp = ((B + 7) // 8) * 8
    if Bp != B:
        text_embeds = jnp.pad(text_embeds, ((0, Bp - B), (0, 0)))
        keep_mask = jnp.pad(keep_mask, ((0, Bp - B), (0, 0)), constant_values=True)

    keep_f = keep_mask.astype(jnp.float32).reshape(Bp, 1)
    null2 = null_embed.reshape(1, d_in)
    b2 = b.reshape(1, d_out)

    itemsize_x = jnp.dtype(out_dtype).itemsize
    cost = pl.CostEstimate(
        flops=2 * Bp * d_in * d_out,
        transcendentals=Bp * d_out,                            # sigmoid per output elem
        bytes_accessed=(d_in * d_out * 2                       # bf16 weight (dominant)
                        + Bp * d_in * itemsize_x               # activations in
                        + Bp * d_out * itemsize_x              # activations out
                        + d_out * 4 + d_in * 4 + Bp * 4),      # bias + null + keep mask
    )

    # single full-width tile: whole problem fits far inside VMEM on v5e/v6e/v7x,
    # so a multi-step grid would only add per-step overhead.
    out = pl.pallas_call(
        _text_embed_stem_kernel,
        out_shape=jax.ShapeDtypeStruct((Bp, d_out), out_dtype),
        grid=(1,),
        in_specs=[
            pl.BlockSpec((Bp, d_in), lambda j: (0, 0)),        # text embeds
            pl.BlockSpec((Bp, 1), lambda j: (0, 0)),           # keep mask
            pl.BlockSpec((1, d_in), lambda j: (0, 0)),         # null text embed
            pl.BlockSpec((d_in, d_out), lambda j: (0, 0)),     # bf16 weight (full)
            pl.BlockSpec((1, d_out), lambda j: (0, 0)),        # bias
        ],
        out_specs=pl.BlockSpec((Bp, d_out), lambda j: (0, 0)),
        compiler_params=pltpu.CompilerParams(
            dimension_semantics=("arbitrary",)),
        cost_estimate=cost,
    )(text_embeds, keep_f, null2, w_bf16, b2)

    return out[:B, None, :]                                    # slice padding, unsqueeze(1)


# ----------------------------------------------------------------------------
# prob_mask_like (JAX equivalent of the torch helper)
# ----------------------------------------------------------------------------
def prob_mask_like(shape, prob, key):
    if prob == 1:
        return jnp.ones(shape, dtype=bool)
    elif prob == 0:
        return jnp.zeros(shape, dtype=bool)
    # TODO(synk): torch's in-place uniform_ RNG stream has no JAX equivalent; uses jax.random.
    return jax.random.uniform(key, shape) < prob


# ----------------------------------------------------------------------------
# TextEmbedder (forward semantics) built on the Pallas kernel
# ----------------------------------------------------------------------------
class TextEmbedderPallas:
    def __init__(self, *, latent_dims=(128, 128), cond_drop_prob=0.0,
                 text_embed_stem_dim=512, key=None):
        # TODO(synk): the T5/CLIP text encoders (embed_texts) have no Pallas equivalent;
        # text_embeds must be provided directly (the original forward also allows this).
        key = jax.random.PRNGKey(0) if key is None else key
        self.latent_dims = tuple(latent_dims)
        self.cond_drop_prob = cond_drop_prob
        self.text_embed_stem_dim = text_embed_stem_dim

        total = sum(self.latent_dims)
        self.total_latent_dim = total
        k_w, k_b, k_n = jax.random.split(key, 3)
        bound = 1.0 / np.sqrt(total)  # matches nn.Linear default init bounds
        # weight stored input-major (D_in, D_out) == torch Linear.weight.T and pre-cast
        # to bf16: the kernel feeds it to the MXU directly and HBM traffic is halved.
        w_f32 = jax.random.uniform(k_w, (total, text_embed_stem_dim), jnp.float32,
                                   -bound, bound)
        self.params = dict(
            w=w_f32.astype(jnp.bfloat16),
            b=jax.random.uniform(k_b, (text_embed_stem_dim,), jnp.float32, -bound, bound),
            null_text_embed=jax.random.normal(k_n, (total,), jnp.float32),
        )

    def forward(self, texts=None, text_embeds=None, cond_drop_prob=None,
                training=False, key=None):
        assert (texts is None) ^ (text_embeds is None)
        if texts is not None:
            raise NotImplementedError(
                "embed_texts (T5/CLIP) is not available; pass text_embeds directly")

        batch = text_embeds.shape[0]

        if training:
            cond_drop_prob = self.cond_drop_prob if cond_drop_prob is None else cond_drop_prob
        else:
            cond_drop_prob = 0.0

        if cond_drop_prob > 0.0:
            assert key is not None, "need a PRNG key for conditioning dropout"
            keep_mask = prob_mask_like((batch, 1), 1.0 - cond_drop_prob, key)
        else:
            keep_mask = jnp.ones((batch, 1), dtype=bool)

        return text_embed_stem_pallas(
            text_embeds, keep_mask,
            self.params["null_text_embed"], self.params["w"], self.params["b"])


# ----------------------------------------------------------------------------
# Pure-JAX references (mirror the PyTorch forward)
# ----------------------------------------------------------------------------
def _ref_forward_bf16(params, text_embeds, keep_mask):
    # matches the kernel's bf16 MXU operand path (bf16 select, bf16 weight, f32 acc)
    x = jnp.where(keep_mask, text_embeds.astype(jnp.bfloat16),
                  params["null_text_embed"].astype(jnp.bfloat16)[None, :])
    y = jnp.dot(x, params["w"], preferred_element_type=jnp.float32) + params["b"][None, :]
    y = y * jax.nn.sigmoid(y)
    return y[:, None, :].astype(text_embeds.dtype)


def _ref_forward_f32(params, text_embeds, keep_mask):
    # f32 math throughout (weight dequantized from bf16); loose check of f32 acc + SiLU
    x = jnp.where(keep_mask, text_embeds, params["null_text_embed"][None, :])
    y = x @ params["w"].astype(jnp.float32) + params["b"][None, :]
    y = y * jax.nn.sigmoid(y)
    return y[:, None, :]


if __name__ == "__main__":
    key = jax.random.PRNGKey(0)
    k_x, k_p, k_drop = jax.random.split(key, 3)

    B = 2
    LATENT_DIMS = (128, 128)       # e.g. t5 + clip latent dims -> total_latent_dim = 256
    STEM_DIM = 512                 # text_embed_stem_dim default

    total = sum(LATENT_DIMS)
    text_embeds = jax.random.normal(k_x, (B, total), jnp.float32)

    embedder = TextEmbedderPallas(latent_dims=LATENT_DIMS, cond_drop_prob=0.25,
                                  text_embed_stem_dim=STEM_DIM, key=k_p)

    # eval path: cond_drop_prob forced to 0.0 (as in the PyTorch module when not training)
    out_eval = jax.block_until_ready(embedder.forward(text_embeds=text_embeds,
                                                      training=False))
    assert out_eval.shape == (B, 1, STEM_DIM)

    # training path: classifier-free conditioning dropout exercised through the same kernel
    out_train = jax.block_until_ready(embedder.forward(text_embeds=text_embeds,
                                                       training=True,
                                                       cond_drop_prob=0.5, key=k_drop))
    assert out_train.shape == (B, 1, STEM_DIM)

    # references
    keep_eval = jnp.ones((B, 1), dtype=bool)
    keep_train = prob_mask_like((B, 1), 1.0 - 0.5, k_drop)

    ref_eval_bf16 = _ref_forward_bf16(embedder.params, text_embeds, keep_eval)
    ref_train_bf16 = _ref_forward_bf16(embedder.params, text_embeds, keep_train)
    ref_eval_f32 = _ref_forward_f32(embedder.params, text_embeds, keep_eval)
    ref_train_f32 = _ref_forward_f32(embedder.params, text_embeds, keep_train)

    # tight check vs a reference that matches the kernel's bf16 operand path
    np.testing.assert_allclose(np.asarray(out_eval), np.asarray(ref_eval_bf16),
                               rtol=1e-3, atol=1e-3)
    np.testing.assert_allclose(np.asarray(out_train), np.asarray(ref_train_bf16),
                               rtol=1e-3, atol=1e-3)
    # looser check vs full-f32 math (bf16 activation-cast error budget)
    np.testing.assert_allclose(np.asarray(out_eval), np.asarray(ref_eval_f32),
                               rtol=2e-2, atol=2e-2)
    np.testing.assert_allclose(np.asarray(out_train), np.asarray(ref_train_f32),
                               rtol=2e-2, atol=2e-2)

    print("KERNEL_OK")
</pallas_src>

<mosaic_0001>
module attributes {stable_mosaic.version = 11 : i64} {
  func.func @_text_embed_stem_kernel(%arg0: i32, %arg1: memref<8x256xf32, #tpu.memory_space<vmem>>, %arg2: memref<8x1xf32, #tpu.memory_space<vmem>>, %arg3: memref<1x256xf32, #tpu.memory_space<vmem>>, %arg4: memref<256x512xbf16, #tpu.memory_space<vmem>>, %arg5: memref<1x512xf32, #tpu.memory_space<vmem>>, %arg6: memref<8x512xf32, #tpu.memory_space<vmem>>) attributes {dimension_semantics = [#tpu.dimension_semantics<arbitrary>], iteration_bounds = array<i64: 1>, scalar_prefetch = 0 : i64, scratch_operands = 0 : i64, tpu.core_type = #tpu.core_type<tc>, window_params = [{pipeline_mode = #tpu.pipeline_mode<synchronous>, transform_indices = @transform_0, window_bounds = array<i64: 8, 256>}, {pipeline_mode = #tpu.pipeline_mode<synchronous>, transform_indices = @transform_1, window_bounds = array<i64: 8, 1>}, {pipeline_mode = #tpu.pipeline_mode<synchronous>, transform_indices = @transform_2, window_bounds = array<i64: 1, 256>}, {pipeline_mode = #tpu.pipeline_mode<synchronous>, transform_indices = @transform_3, window_bounds = array<i64: 256, 512>}, {pipeline_mode = #tpu.pipeline_mode<synchronous>, transform_indices = @transform_4, window_bounds = array<i64: 1, 512>}, {pipeline_mode = #tpu.pipeline_mode<synchronous>, transform_indices = @transform_5, window_bounds = array<i64: 8, 512>}]} {
    %c0 = arith.constant 0 : index
    %c0_0 = arith.constant 0 : index
    %0 = vector.load %arg1[%c0, %c0_0] : memref<8x256xf32, #tpu.memory_space<vmem>>, vector<8x256xf32>
    %1 = arith.truncf %0 : vector<8x256xf32> to vector<8x256xbf16>
    %c0_1 = arith.constant 0 : index
    %c0_2 = arith.constant 0 : index
    %2 = vector.load %arg3[%c0_1, %c0_2] : memref<1x256xf32, #tpu.memory_space<vmem>>, vector<1x256xf32>
    %3 = arith.truncf %2 : vector<1x256xf32> to vector<1x256xbf16>
    %c0_3 = arith.constant 0 : index
    %c0_4 = arith.constant 0 : index
    %4 = vector.load %arg2[%c0_3, %c0_4] : memref<8x1xf32, #tpu.memory_space<vmem>>, vector<8x1xf32>
    %cst = arith.constant 5.000000e-01 : f32
    %5 = vector.broadcast %cst : f32 to vector<8x1xf32>
    %6 = arith.cmpf ogt, %4, %5 : vector<8x1xf32>
    %7 = vector.shape_cast %6 : vector<8x1xi1> to vector<8x1xi1>
    %8 = vector.broadcast %7 : vector<8x1xi1> to vector<8x256xi1>
    %9 = vector.shape_cast %3 : vector<1x256xbf16> to vector<1x256xbf16>
    %10 = vector.broadcast %9 : vector<1x256xbf16> to vector<8x256xbf16>
    %11 = arith.select %8, %1, %10 : vector<8x256xi1>, vector<8x256xbf16>
    %c0_5 = arith.constant 0 : index
    %c0_6 = arith.constant 0 : index
    %12 = vector.load %arg4[%c0_5, %c0_6] : memref<256x512xbf16, #tpu.memory_space<vmem>>, vector<256x512xbf16>
    %cst_7 = arith.constant dense<0.000000e+00> : vector<8x512xf32>
    %13 = tpu.matmul %11, %12, %cst_7 {dimension_numbers = #tpu.dot_dimension_numbers<[1], [0], [0], [1], [0, 0, 1, 1], [], []>} : vector<8x256xbf16>, vector<256x512xbf16>, vector<8x512xf32> -> vector<8x512xf32>
    %c0_8 = arith.constant 0 : index
    %c0_9 = arith.constant 0 : index
    %14 = vector.load %arg5[%c0_8, %c0_9] : memref<1x512xf32, #tpu.memory_space<vmem>>, vector<1x512xf32>
    %15 = vector.broadcast %14 : vector<1x512xf32> to vector<8x512xf32>
    %16 = arith.addf %13, %15 : vector<8x512xf32>
    %17 = arith.negf %16 : vector<8x512xf32>
    %18 = math.exp %17 : vector<8x512xf32>
    %cst_10 = arith.constant 1.000000e+00 : f32
    %19 = vector.broadcast %cst_10 : f32 to vector<8x512xf32>
    %20 = arith.addf %19, %18 : vector<8x512xf32>
    %21 = arith.divf %19, %20 : vector<8x512xf32>
    %22 = arith.mulf %16, %21 : vector<8x512xf32>
    %c0_11 = arith.constant 0 : index
    %c0_12 = arith.constant 0 : index
    %23 = vector.load %arg6[%c0_11, %c0_12] : memref<8x512xf32, #tpu.memory_space<vmem>>, vector<8x512xf32>
    tpu.vector_store %arg6[%c0_11, %c0_12], %22 {strides = array<i32>} : memref<8x512xf32, #tpu.memory_space<vmem>>, vector<8x512xf32>,
    return
  }
  func.func @transform_0(%arg0: i32) -> (i32, i32) {
    %c0_i32 = arith.constant 0 : i32
    %c0_i32_0 = arith.constant 0 : i32
    %c0_i32_1 = arith.constant 0 : i32
    return %c0_i32, %c0_i32_0 : i32, i32
  }
  func.func @transform_1(%arg0: i32) -> (i32, i32) {
    %c0_i32 = arith.constant 0 : i32
    %c0_i32_0 = arith.constant 0 : i32
    %c0_i32_1 = arith.constant 0 : i32
    return %c0_i32, %c0_i32_0 : i32, i32
  }
  func.func @transform_2(%arg0: i32) -> (i32, i32) {
    %c0_i32 = arith.constant 0 : i32
    %c0_i32_0 = arith.constant 0 : i32
    %c0_i32_1 = arith.constant 0 : i32
    return %c0_i32, %c0_i32_0 : i32, i32
  }
  func.func @transform_3(%arg0: i32) -> (i32, i32) {
    %c0_i32 = arith.constant 0 : i32
    %c0_i32_0 = arith.constant 0 : i32
    %c0_i32_1 = arith.constant 0 : i32
    return %c0_i32, %c0_i32_0 : i32, i32
  }
  func.func @transform_4(%arg0: i32) -> (i32, i32) {
    %c0_i32 = arith.constant 0 : i32
    %c0_i32_0 = arith.constant 0 : i32
    %c0_i32_1 = arith.constant 0 : i32
    return %c0_i32, %c0_i32_0 : i32, i32
  }
  func.func @transform_5(%arg0: i32) -> (i32, i32) {
    %c0_i32 = arith.constant 0 : i32
    %c0_i32_0 = arith.constant 0 : i32
    %c0_i32_1 = arith.constant 0 : i32
    return %c0_i32, %c0_i32_0 : i32, i32
  }
}

</mosaic_0001>

<llo_original>
// kernel: tpu_custom_call.1
$region0: #{tpu_custom_call.1}
  #allocation0 [shape = 'u32[]', space=smem, size = 0x4, offset = 0x4, fixed_abs, tag = 'smem constant byte address 0x4 - core index']
  #allocation1 [shape = 'u32[72,128]{1,0:T(1,128)}', space=vmem, size = 0x9000, scoped, tag = 'internal scratch']
  %s0 = inlined_call_operand.hbm [shape: f32[8,256], index: 0, kind: input, shape index: {}]
  %s1 = inlined_call_operand.vmem [shape: f32[8,1], index: 1, kind: input, shape index: {}]
  %s2 = inlined_call_operand.vmem [shape: f32[1,256], index: 2, kind: input, shape index: {}]
  %s3 = inlined_call_operand.hbm [shape: bf16[256,512], index: 3, kind: input, shape index: {}]
  %s4 = inlined_call_operand.vmem [shape: f32[1,512], index: 4, kind: input, shape index: {}]
  %s5 = inlined_call_operand.hbm [shape: f32[8,512], index: 5, kind: output, shape index: {}]
  %s6 = sld [smem:[#allocation0]]
  $region38: #{tpu_custom_call.1} parent=0
    _
  %s8 = ssub.s32 1, %s6
  %s9 = scalar_select 0, %s8, %s6
  $region1: #{tpu_custom_call.1} parent=0
    #allocation2 [shape = 'u8[8192]{0}', space=vmem, size = 0x2000, scoped, tag = 'input window, operand 0, single buffered']
    #allocation3 [shape = 's32[1]{0}', space=sflag, size = 0x4, scoped, tag = 'scoped memory for tpu_custom_call.1']
    #allocation4 [shape = 's32[1]{0}', space=sflag, size = 0x4, scoped, tag = 'scoped memory for tpu_custom_call.1']
    #allocation5 [shape = 'u8[262144]{0}', space=vmem, size = 0x40000, scoped, tag = 'input window, operand 3, single buffered']
    #allocation6 [shape = 's32[1]{0}', space=sflag, size = 0x4, scoped, tag = 'scoped memory for tpu_custom_call.1']
    #allocation7 [shape = 'u8[16384]{0}', space=vmem, size = 0x4000, scoped, tag = 'output window, operand 0, single buffered']
    %10 = vsyncpa [#allocation3], 0
    %11 = vsyncpa [#allocation6], 0
    %12 = vsyncpa [#allocation4], 0
    // Predicated region
    $region2: #{tpu_custom_call.1} parent=1 // pred_check
      _
    $region3: #{tpu_custom_call.1} parent=1 // pred_check_branch
      %14 = sbr.rel (0) target = $region5
    $region4: #{tpu_custom_call.1} parent=1 // pred_region
      %16 = vsyncadd [#allocation3], 0
      %s18 = sshll.u32 %s0, 4
      %s19 = int_to_ptr.hbm [resolvable:$true] %s18
      %s20 = sshll.u32 [#allocation2], 4
      %s21 = int_to_ptr.vmem [resolvable:$true] %s20
      %23 = dma.hbm_to_vmem [thread:$0]  %s19, 256, %s21, [#allocation3]
    $region5: #{tpu_custom_call.1} parent=1 // pred_fallthru
      _
    // Predicated region
    $region6: #{tpu_custom_call.1} parent=1 // pred_check
      _
    $region7: #{tpu_custom_call.1} parent=1 // pred_check_branch
      %25 = sbr.rel (0) target = $region9
    $region8: #{tpu_custom_call.1} parent=1 // pred_region
      _
    $region9: #{tpu_custom_call.1} parent=1 // pred_fallthru
      _
    // Predicated region
    $region10: #{tpu_custom_call.1} parent=1 // pred_check
      _
    $region11: #{tpu_custom_call.1} parent=1 // pred_check_branch
      %27 = sbr.rel (0) target = $region13
    $region12: #{tpu_custom_call.1} parent=1 // pred_region
      _
    $region13: #{tpu_custom_call.1} parent=1 // pred_fallthru
      _
    // Predicated region
    $region14: #{tpu_custom_call.1} parent=1 // pred_check
      _
    $region15: #{tpu_custom_call.1} parent=1 // pred_check_branch
      %29 = sbr.rel (0) target = $region17
    $region16: #{tpu_custom_call.1} parent=1 // pred_region
      %31 = vsyncadd [#allocation6], 0
      %s32 = sshll.u32 %s3, 4
      %s33 = int_to_ptr.hbm [resolvable:$true] %s32
      %s34 = sshll.u32 [#allocation5], 4
      %s35 = int_to_ptr.vmem [resolvable:$true] %s34
      %40 = dma.hbm_to_vmem [thread:$0]  %s33, 8192, %s35, [#allocation6], 256, 256, 16
    $region17: #{tpu_custom_call.1} parent=1 // pred_fallthru
      _
    // Predicated region
    $region18: #{tpu_custom_call.1} parent=1 // pred_check
      _
    $region19: #{tpu_custom_call.1} parent=1 // pred_check_branch
      %42 = sbr.rel (0) target = $region21
    $region20: #{tpu_custom_call.1} parent=1 // pred_region
      _
    $region21: #{tpu_custom_call.1} parent=1 // pred_fallthru
      _
    // Predicated region
    $region22: #{tpu_custom_call.1} parent=1 // pred_check
      _
    $region23: #{tpu_custom_call.1} parent=1 // pred_check_branch
      %44 = sbr.rel (0) target = $region25
    $region24: #{tpu_custom_call.1} parent=1 // pred_region
      %46 = dma.done [#allocation3], 256
    $region25: #{tpu_custom_call.1} parent=1 // pred_fallthru
      _
    // Predicated region
    $region26: #{tpu_custom_call.1} parent=1 // pred_check
      _
    $region27: #{tpu_custom_call.1} parent=1 // pred_check_branch
      %48 = sbr.rel (0) target = $region29
    $region28: #{tpu_custom_call.1} parent=1 // pred_region
      %50 = dma.done [#allocation6], 8192
    $region29: #{tpu_custom_call.1} parent=1 // pred_fallthru
      _
    %v51 = vld [vmem:[#allocation2] sm:$0xff]
    %v52 = vld [vmem:[#allocation2 + $0x8] sm:$0xff]
    %v53 = vpack.c.bf16 %v52, %v51
    %v54 = vld [vmem:[%s2] sm:$0x3]
    %v56 = vperm.slane %v54, 0
    %v57 = vperm.slane %v54, 1
    %v60 = vpack.c.bf16 %v57, %v56
    %v61 = vld [vmem:[%s1] sm:$0xff]
    %vm62 = vcmp.gt.f32.partialorder %v61, 0.5
    %v63 = vsel %vm62, 1, 0
    %64 = vset.pattern.permute.xlu0 0
    %65 = vperm.xlu0 %64, %v63
    %v66 = vpop.permute.xlu0 %65
    %vm67 = vcmp.eq.s32.totalorder %v66, 1
    %v69 = vunpack.c.l.b16 %v60
    %v70 = vunpack.c.h.b16 %v60
    %v71 = vpack.c.b16 %v69, %v69
    %v72 = vpack.c.b16 %v70, %v70
    %v74 = vpack.i.b16 %v71, %v71
    %v76 = vperm.slane %v74, 0
    %v78 = vpack.i.b16 %v72, %v72
    %v80 = vperm.slane %v78, 0
    %vm81 = vmpackc.low %vm67, %vm67
    %v84 = vunpack.c.l.b16 %v76
    %v85 = vunpack.c.l.b16 %v80
    %v86 = vpack.c.b16 %v85, %v84
    %v88 = vsel %vm81, %v53, %v86
    %v89 = vld [vmem:[#allocation5] sm:$0xff]
    %v90 = vld [vmem:[#allocation5 + $0x8] sm:$0xff]
    %v91 = vld [vmem:[#allocation5 + $0x10] sm:$0xff]
    %v92 = vld [vmem:[#allocation5 + $0x18] sm:$0xff]
    %v93 = vld [vmem:[#allocation5 + $0x20] sm:$0xff]
    %v94 = vld [vmem:[#allocation5 + $0x28] sm:$0xff]
    %v95 = vld [vmem:[#allocation5 + $0x30] sm:$0xff]
    %v96 = vld [vmem:[#allocation5 + $0x38] sm:$0xff]
    %v97 = vld [vmem:[#allocation5 + $0x40] sm:$0xff]
    %v98 = vld [vmem:[#allocation5 + $0x48] sm:$0xff]
    %v99 = vld [vmem:[#allocation5 + $0x50] sm:$0xff]
    %v100 = vld [vmem:[#allocation5 + $0x58] sm:$0xff]
    %v101 = vld [vmem:[#allocation5 + $0x60] sm:$0xff]
    %v102 = vld [vmem:[#allocation5 + $0x68] sm:$0xff]
    %v103 = vld [vmem:[#allocation5 + $0x70] sm:$0xff]
    %v104 = vld [vmem:[#allocation5 + $0x78] sm:$0xff]
    %v105 = vld [vmem:[#allocation5 + $0x80] sm:$0xff]
    %v106 = vld [vmem:[#allocation5 + $0x88] sm:$0xff]
    %v107 = vld [vmem:[#allocation5 + $0x90] sm:$0xff]
    %v108 = vld [vmem:[#allocation5 + $0x98] sm:$0xff]
    %v109 = vld [vmem:[#allocation5 + $0xa0] sm:$0xff]
    %v110 = vld [vmem:[#allocation5 + $0xa8] sm:$0xff]
    %v111 = vld [vmem:[#allocation5 + $0xb0] sm:$0xff]
    %v112 = vld [vmem:[#allocation5 + $0xb8] sm:$0xff]
    %v113 = vld [vmem:[#allocation5 + $0xc0] sm:$0xff]
    %v114 = vld [vmem:[#allocation5 + $0xc8] sm:$0xff]
    %v115 = vld [vmem:[#allocation5 + $0xd0] sm:$0xff]
    %v116 = vld [vmem:[#allocation5 + $0xd8] sm:$0xff]
    %v117 = vld [vmem:[#allocation5 + $0xe0] sm:$0xff]
    %v118 = vld [vmem:[#allocation5 + $0xe8] sm:$0xff]
    %v119 = vld [vmem:[#allocation5 + $0xf0] sm:$0xff]
    %v120 = vld [vmem:[#allocation5 + $0xf8] sm:$0xff]
    %v121 = vld [vmem:[#allocation5 + $0x100] sm:$0xff]
    %v122 = vld [vmem:[#allocation5 + $0x108] sm:$0xff]
    %v123 = vld [vmem:[#allocation5 + $0x110] sm:$0xff]
    %v124 = vld [vmem:[#allocation5 + $0x118] sm:$0xff]
    %v125 = vld [vmem:[#allocation5 + $0x120] sm:$0xff]
    %v126 = vld [vmem:[#allocation5 + $0x128] sm:$0xff]
    %v127 = vld [vmem:[#allocation5 + $0x130] sm:$0xff]
    %v128 = vld [vmem:[#allocation5 + $0x138] sm:$0xff]
    %v129 = vld [vmem:[#allocation5 + $0x140] sm:$0xff]
    %v130 = vld [vmem:[#allocation5 + $0x148] sm:$0xff]
    %v131 = vld [vmem:[#allocation5 + $0x150] sm:$0xff]
    %v132 = vld [vmem:[#allocation5 + $0x158] sm:$0xff]
    %v133 = vld [vmem:[#allocation5 + $0x160] sm:$0xff]
    %v134 = vld [vmem:[#allocation5 + $0x168] sm:$0xff]
    %v135 = vld [vmem:[#allocation5 + $0x170] sm:$0xff]
    %v136 = vld [vmem:[#allocation5 + $0x178] sm:$0xff]
    %v137 = vld [vmem:[#allocation5 + $0x180] sm:$0xff]
    %v138 = vld [vmem:[#allocation5 + $0x188] sm:$0xff]
    %v139 = vld [vmem:[#allocation5 + $0x190] sm:$0xff]
    %v140 = vld [vmem:[#allocation5 + $0x198] sm:$0xff]
    %v141 = vld [vmem:[#allocation5 + $0x1a0] sm:$0xff]
    %v142 = vld [vmem:[#allocation5 + $0x1a8] sm:$0xff]
    %v143 = vld [vmem:[#allocation5 + $0x1b0] sm:$0xff]
    %v144 = vld [vmem:[#allocation5 + $0x1b8] sm:$0xff]
    %v145 = vld [vmem:[#allocation5 + $0x1c0] sm:$0xff]
    %v146 = vld [vmem:[#allocation5 + $0x1c8] sm:$0xff]
    %v147 = vld [vmem:[#allocation5 + $0x1d0] sm:$0xff]
    %v148 = vld [vmem:[#allocation5 + $0x1d8] sm:$0xff]
    %v149 = vld [vmem:[#allocation5 + $0x1e0] sm:$0xff]
    %v150 = vld [vmem:[#allocation5 + $0x1e8] sm:$0xff]
    %v151 = vld [vmem:[#allocation5 + $0x1f0] sm:$0xff]
    %v152 = vld [vmem:[#allocation5 + $0x1f8] sm:$0xff]
    %v153 = vld [vmem:[%s4] sm:$0xf]
    %v155 = vperm.slane %v153, 0
    %v156 = vperm.slane %v153, 1
    %v157 = vperm.slane %v153, 2
    %v158 = vperm.slane %v153, 3
    %v164 = vunpack.c.l.b16 %v88
    %v165 = vunpack.c.h.b16 %v88
    %v166 = vpack.c.b16 %v164, %v164
    %v167 = vpack.c.b16 %v165, %v165
    %v234 = vunpack.c.l.b16 %v89
    %v235 = vunpack.c.h.b16 %v89
    %v236 = vunpack.c.l.b16 %v90
    %v237 = vunpack.c.h.b16 %v90
    %v238 = vunpack.c.l.b16 %v91
    %v239 = vunpack.c.h.b16 %v91
    %v240 = vunpack.c.l.b16 %v92
    %v241 = vunpack.c.h.b16 %v92
    %v242 = vunpack.c.l.b16 %v93
    %v243 = vunpack.c.h.b16 %v93
    %v244 = vunpack.c.l.b16 %v94
    %v245 = vunpack.c.h.b16 %v94
    %v246 = vunpack.c.l.b16 %v95
    %v247 = vunpack.c.h.b16 %v95
    %v248 = vunpack.c.l.b16 %v96
    %v249 = vunpack.c.h.b16 %v96
    %v250 = vunpack.c.l.b16 %v97
    %v251 = vunpack.c.h.b16 %v97
    %v252 = vunpack.c.l.b16 %v98
    %v253 = vunpack.c.h.b16 %v98
    %v254 = vunpack.c.l.b16 %v99
    %v255 = vunpack.c.h.b16 %v99
    %v256 = vunpack.c.l.b16 %v100
    %v257 = vunpack.c.h.b16 %v100
    %v258 = vunpack.c.l.b16 %v101
    %v259 = vunpack.c.h.b16 %v101
    %v260 = vunpack.c.l.b16 %v102
    %v261 = vunpack.c.h.b16 %v102
    %v262 = vunpack.c.l.b16 %v103
    %v263 = vunpack.c.h.b16 %v103
    %v264 = vunpack.c.l.b16 %v104
    %v265 = vunpack.c.h.b16 %v104
    %v266 = vunpack.c.l.b16 %v105
    %v267 = vunpack.c.h.b16 %v105
    %v268 = vunpack.c.l.b16 %v106
    %v269 = vunpack.c.h.b16 %v106
    %v270 = vunpack.c.l.b16 %v107
    %v271 = vunpack.c.h.b16 %v107
    %v272 = vunpack.c.l.b16 %v108
    %v273 = vunpack.c.h.b16 %v108
    %v274 = vunpack.c.l.b16 %v109
    %v275 = vunpack.c.h.b16 %v109
    %v276 = vunpack.c.l.b16 %v110
    %v277 = vunpack.c.h.b16 %v110
    %v278 = vunpack.c.l.b16 %v111
    %v279 = vunpack.c.h.b16 %v111
    %v280 = vunpack.c.l.b16 %v112
    %v281 = vunpack.c.h.b16 %v112
    %v282 = vunpack.c.l.b16 %v113
    %v283 = vunpack.c.h.b16 %v113
    %v284 = vunpack.c.l.b16 %v114
    %v285 = vunpack.c.h.b16 %v114
    %v286 = vunpack.c.l.b16 %v115
    %v287 = vunpack.c.h.b16 %v115
    %v288 = vunpack.c.l.b16 %v116
    %v289 = vunpack.c.h.b16 %v116
    %v290 = vunpack.c.l.b16 %v117
    %v291 = vunpack.c.h.b16 %v117
    %v292 = vunpack.c.l.b16 %v118
    %v293 = vunpack.c.h.b16 %v118
    %v294 = vunpack.c.l.b16 %v119
    %v295 = vunpack.c.h.b16 %v119
    %v296 = vunpack.c.l.b16 %v120
    %v297 = vunpack.c.h.b16 %v120
    %v298 = vunpack.c.l.b16 %v121
    %v299 = vunpack.c.h.b16 %v121
    %v300 = vunpack.c.l.b16 %v122
    %v301 = vunpack.c.h.b16 %v122
    %v302 = vunpack.c.l.b16 %v123
    %v303 = vunpack.c.h.b16 %v123
    %v304 = vunpack.c.l.b16 %v124
    %v305 = vunpack.c.h.b16 %v124
    %v306 = vunpack.c.l.b16 %v125
    %v307 = vunpack.c.h.b16 %v125
    %v308 = vunpack.c.l.b16 %v126
    %v309 = vunpack.c.h.b16 %v126
    %v310 = vunpack.c.l.b16 %v127
    %v311 = vunpack.c.h.b16 %v127
    %v312 = vunpack.c.l.b16 %v128
    %v313 = vunpack.c.h.b16 %v128
    %v314 = vunpack.c.l.b16 %v129
    %v315 = vunpack.c.h.b16 %v129
    %v316 = vunpack.c.l.b16 %v130
    %v317 = vunpack.c.h.b16 %v130
    %v318 = vunpack.c.l.b16 %v131
    %v319 = vunpack.c.h.b16 %v131
    %v320 = vunpack.c.l.b16 %v132
    %v321 = vunpack.c.h.b16 %v132
    %v322 = vunpack.c.l.b16 %v133
    %v323 = vunpack.c.h.b16 %v133
    %v324 = vunpack.c.l.b16 %v134
    %v325 = vunpack.c.h.b16 %v134
    %v326 = vunpack.c.l.b16 %v135
    %v327 = vunpack.c.h.b16 %v135
    %v328 = vunpack.c.l.b16 %v136
    %v329 = vunpack.c.h.b16 %v136
    %v330 = vunpack.c.l.b16 %v137
    %v331 = vunpack.c.h.b16 %v137
    %v332 = vunpack.c.l.b16 %v138
    %v333 = vunpack.c.h.b16 %v138
    %v334 = vunpack.c.l.b16 %v139
    %v335 = vunpack.c.h.b16 %v139
    %v336 = vunpack.c.l.b16 %v140
    %v337 = vunpack.c.h.b16 %v140
    %v338 = vunpack.c.l.b16 %v141
    %v339 = vunpack.c.h.b16 %v141
    %v340 = vunpack.c.l.b16 %v142
    %v341 = vunpack.c.h.b16 %v142
    %v342 = vunpack.c.l.b16 %v143
    %v343 = vunpack.c.h.b16 %v143
    %v344 = vunpack.c.l.b16 %v144
    %v345 = vunpack.c.h.b16 %v144
    %v346 = vunpack.c.l.b16 %v145
    %v347 = vunpack.c.h.b16 %v145
    %v348 = vunpack.c.l.b16 %v146
    %v349 = vunpack.c.h.b16 %v146
    %v350 = vunpack.c.l.b16 %v147
    %v351 = vunpack.c.h.b16 %v147
    %v352 = vunpack.c.l.b16 %v148
    %v353 = vunpack.c.h.b16 %v148
    %v354 = vunpack.c.l.b16 %v149
    %v355 = vunpack.c.h.b16 %v149
    %v356 = vunpack.c.l.b16 %v150
    %v357 = vunpack.c.h.b16 %v150
    %v358 = vunpack.c.l.b16 %v151
    %v359 = vunpack.c.h.b16 %v151
    %v360 = vunpack.c.l.b16 %v152
    %v361 = vunpack.c.h.b16 %v152
    %v362 = vpack.c.b16 %v238, %v234
    %v363 = vpack.c.b16 %v239, %v235
    %v364 = vpack.c.b16 %v240, %v236
    %v365 = vpack.c.b16 %v241, %v237
    %v366 = vpack.c.b16 %v246, %v242
    %v367 = vpack.c.b16 %v247, %v243
    %v368 = vpack.c.b16 %v248, %v244
    %v369 = vpack.c.b16 %v249, %v245
    %v370 = vpack.c.b16 %v254, %v250
    %v371 = vpack.c.b16 %v255, %v251
    %v372 = vpack.c.b16 %v256, %v252
    %v373 = vpack.c.b16 %v257, %v253
    %v374 = vpack.c.b16 %v262, %v258
    %v375 = vpack.c.b16 %v263, %v259
    %v376 = vpack.c.b16 %v264, %v260
    %v377 = vpack.c.b16 %v265, %v261
    %v378 = vpack.c.b16 %v270, %v266
    %v379 = vpack.c.b16 %v271, %v267
    %v380 = vpack.c.b16 %v272, %v268
    %v381 = vpack.c.b16 %v273, %v269
    %v382 = vpack.c.b16 %v278, %v274
    %v383 = vpack.c.b16 %v279, %v275
    %v384 = vpack.c.b16 %v280, %v276
    %v385 = vpack.c.b16 %v281, %v277
    %v386 = vpack.c.b16 %v286, %v282
    %v387 = vpack.c.b16 %v287, %v283
    %v388 = vpack.c.b16 %v288, %v284
    %v389 = vpack.c.b16 %v289, %v285
    %v390 = vpack.c.b16 %v294, %v290
    %v391 = vpack.c.b16 %v295, %v291
    %v392 = vpack.c.b16 %v296, %v292
    %v393 = vpack.c.b16 %v297, %v293
    %v394 = vpack.c.b16 %v302, %v298
    %v395 = vpack.c.b16 %v303, %v299
    %v396 = vpack.c.b16 %v304, %v300
    %v397 = vpack.c.b16 %v305, %v301
    %v398 = vpack.c.b16 %v310, %v306
    %v399 = vpack.c.b16 %v311, %v307
    %v400 = vpack.c.b16 %v312, %v308
    %v401 = vpack.c.b16 %v313, %v309
    %v402 = vpack.c.b16 %v318, %v314
    %v403 = vpack.c.b16 %v319, %v315
    %v404 = vpack.c.b16 %v320, %v316
    %v405 = vpack.c.b16 %v321, %v317
    %v406 = vpack.c.b16 %v326, %v322
    %v407 = vpack.c.b16 %v327, %v323
    %v408 = vpack.c.b16 %v328, %v324
    %v409 = vpack.c.b16 %v329, %v325
    %v410 = vpack.c.b16 %v334, %v330
    %v411 = vpack.c.b16 %v335, %v331
    %v412 = vpack.c.b16 %v336, %v332
    %v413 = vpack.c.b16 %v337, %v333
    %v414 = vpack.c.b16 %v342, %v338
    %v415 = vpack.c.b16 %v343, %v339
    %v416 = vpack.c.b16 %v344, %v340
    %v417 = vpack.c.b16 %v345, %v341
    %v418 = vpack.c.b16 %v350, %v346
    %v419 = vpack.c.b16 %v351, %v347
    %v420 = vpack.c.b16 %v352, %v348
    %v421 = vpack.c.b16 %v353, %v349
    %v422 = vpack.c.b16 %v358, %v354
    %v423 = vpack.c.b16 %v359, %v355
    %v424 = vpack.c.b16 %v360, %v356
    %v425 = vpack.c.b16 %v361, %v357
    %490 = vmatpush.bf16.msra.mxu0 %v390
    %491 = vmatpush.bf16.msra.mxu0 %v386
    %492 = vmatpush.bf16.msra.mxu0 %v382
    %493 = vmatpush.bf16.msra.mxu0 %v378
    %494 = vmatpush.bf16.msra.mxu0 %v374
    %495 = vmatpush.bf16.msra.mxu0 %v370
    %496 = vmatpush.bf16.msra.mxu0 %v366
    %497 = vmatpush.bf16.msra.mxu0 %v362
    %498 = vmatmul.bf16.gmra.mxu0 %v166
    %v499 = vpop.f32.mrf.mxu0
    %v500 = vadd.f32 %v155, %v499
    %v501 = vpop.f32.mrf.mxu0
    %502 = vdwg.mxu0
    %503 = vmatpush.bf16.msra.mxu0 %v422
    %504 = vmatpush.bf16.msra.mxu0 %v418
    %505 = vmatpush.bf16.msra.mxu0 %v414
    %506 = vmatpush.bf16.msra.mxu0 %v410
    %507 = vmatpush.bf16.msra.mxu0 %v406
    %508 = vmatpush.bf16.msra.mxu0 %v402
    %509 = vmatpush.bf16.msra.mxu0 %v398
    %510 = vmatpush.bf16.msra.mxu0 %v394
    %511 = vmatmul.bf16.gmra.mxu0 %v167
    %v512 = vpop.f32.mrf.mxu0
    %v513 = vadd.f32 %v500, %v512
    %v514 = vpop.f32.mrf.mxu0
    %515 = vdwg.mxu0
    %516 = vmatpush.bf16.msra.mxu0 %v391
    %517 = vmatpush.bf16.msra.mxu0 %v387
    %518 = vmatpush.bf16.msra.mxu0 %v383
    %519 = vmatpush.bf16.msra.mxu0 %v379
    %520 = vmatpush.bf16.msra.mxu0 %v375
    %521 = vmatpush.bf16.msra.mxu0 %v371
    %522 = vmatpush.bf16.msra.mxu0 %v367
    %523 = vmatpush.bf16.msra.mxu0 %v363
    %524 = vmatmul.bf16.gmra.mxu0 %v166
    %v525 = vpop.f32.mrf.mxu0
    %v526 = vadd.f32 %v156, %v525
    %v527 = vpop.f32.mrf.mxu0
    %528 = vdwg.mxu0
    %529 = vmatpush.bf16.msra.mxu0 %v423
    %530 = vmatpush.bf16.msra.mxu0 %v419
    %531 = vmatpush.bf16.msra.mxu0 %v415
    %532 = vmatpush.bf16.msra.mxu0 %v411
    %533 = vmatpush.bf16.msra.mxu0 %v407
    %534 = vmatpush.bf16.msra.mxu0 %v403
    %535 = vmatpush.bf16.msra.mxu0 %v399
    %536 = vmatpush.bf16.msra.mxu0 %v395
    %537 = vmatmul.bf16.gmra.mxu0 %v167
    %v538 = vpop.f32.mrf.mxu0
    %v539 = vadd.f32 %v526, %v538
    %v540 = vpop.f32.mrf.mxu0
    %541 = vdwg.mxu0
    %542 = vmatpush.bf16.msra.mxu0 %v392
    %543 = vmatpush.bf16.msra.mxu0 %v388
    %544 = vmatpush.bf16.msra.mxu0 %v384
    %545 = vmatpush.bf16.msra.mxu0 %v380
    %546 = vmatpush.bf16.msra.mxu0 %v376
    %547 = vmatpush.bf16.msra.mxu0 %v372
    %548 = vmatpush.bf16.msra.mxu0 %v368
    %549 = vmatpush.bf16.msra.mxu0 %v364
    %550 = vmatmul.bf16.gmra.mxu0 %v166
    %v551 = vpop.f32.mrf.mxu0
    %v552 = vadd.f32 %v157, %v551
    %v553 = vpop.f32.mrf.mxu0
    %554 = vdwg.mxu0
    %555 = vmatpush.bf16.msra.mxu0 %v424
    %556 = vmatpush.bf16.msra.mxu0 %v420
    %557 = vmatpush.bf16.msra.mxu0 %v416
    %558 = vmatpush.bf16.msra.mxu0 %v412
    %559 = vmatpush.bf16.msra.mxu0 %v408
    %560 = vmatpush.bf16.msra.mxu0 %v404
    %561 = vmatpush.bf16.msra.mxu0 %v400
    %562 = vmatpush.bf16.msra.mxu0 %v396
    %563 = vmatmul.bf16.gmra.mxu0 %v167
    %v564 = vpop.f32.mrf.mxu0
    %v565 = vadd.f32 %v552, %v564
    %v566 = vpop.f32.mrf.mxu0
    %567 = vdwg.mxu0
    %568 = vmatpush.bf16.msra.mxu0 %v393
    %569 = vmatpush.bf16.msra.mxu0 %v389
    %570 = vmatpush.bf16.msra.mxu0 %v385
    %571 = vmatpush.bf16.msra.mxu0 %v381
    %572 = vmatpush.bf16.msra.mxu0 %v377
    %573 = vmatpush.bf16.msra.mxu0 %v373
    %574 = vmatpush.bf16.msra.mxu0 %v369
    %575 = vmatpush.bf16.msra.mxu0 %v365
    %576 = vmatmul.bf16.gmra.mxu0 %v166
    %v577 = vpop.f32.mrf.mxu0
    %v578 = vadd.f32 %v158, %v577
    %v579 = vpop.f32.mrf.mxu0
    %580 = vdwg.mxu0
    %581 = vmatpush.bf16.msra.mxu0 %v425
    %582 = vmatpush.bf16.msra.mxu0 %v421
    %583 = vmatpush.bf16.msra.mxu0 %v417
    %584 = vmatpush.bf16.msra.mxu0 %v413
    %585 = vmatpush.bf16.msra.mxu0 %v409
    %586 = vmatpush.bf16.msra.mxu0 %v405
    %587 = vmatpush.bf16.msra.mxu0 %v401
    %588 = vmatpush.bf16.msra.mxu0 %v397
    %589 = vmatmul.bf16.gmra.mxu0 %v167
    %v590 = vpop.f32.mrf.mxu0
    %v591 = vadd.f32 %v578, %v590
    %v592 = vpop.f32.mrf.mxu0
    %593 = vdwg.mxu0
    %v594 = vxor.u32 %v513, 2147483648
    %v595 = vxor.u32 %v539, 2147483648
    %v596 = vxor.u32 %v565, 2147483648
    %v597 = vxor.u32 %v591, 2147483648
    %v598 = vmul.f32 %v594, 1.442695
    %v599 = vpow.pop %v598
    %v600 = vmul.f32 %v595, 1.442695
    %v601 = vpow.pop %v600
    %v602 = vmul.f32 %v596, 1.442695
    %v603 = vpow.pop %v602
    %v604 = vmul.f32 %v597, 1.442695
    %v605 = vpow.pop %v604
    %v606 = vadd.f32 %v599, 1.0
    %v607 = vadd.f32 %v601, 1.0
    %v608 = vadd.f32 %v603, 1.0
    %v609 = vadd.f32 %v605, 1.0
    %v610 = vrcp.pop %v606
    %v611 = vmul.f32 %v606, %v610
    %v612 = vsub.f32 1.0, %v611
    %v613 = vmul.f32 %v610, %v612
    %v614 = vadd.f32 %v610, %v613
    %vm615 = vweird.f32 %v606
    %vm616 = vweird.f32 %v610
    %vm617 = vmor %vm615, %vm616
    %v618 = vsel %vm617, %v610, %v614
    %v619 = vand.u32 2147483647, %v606
    %vm620 = vcmp.eq.f32.partialorder %v619, 8.507059e+37
    %v621 = vand.u32 %v606, 2147483648
    %v622 = vor.u32 1.1754944e-38, %v621
    %v623 = vsel %vm620, %v622, %v618
    %v624 = vmul.f32 1.0, %v623
    %v625 = vrcp.pop %v607
    %v626 = vmul.f32 %v607, %v625
    %v627 = vsub.f32 1.0, %v626
    %v628 = vmul.f32 %v625, %v627
    %v629 = vadd.f32 %v625, %v628
    %vm630 = vweird.f32 %v607
    %vm631 = vweird.f32 %v625
    %vm632 = vmor %vm630, %vm631
    %v633 = vsel %vm632, %v625, %v629
    %v634 = vand.u32 2147483647, %v607
    %vm635 = vcmp.eq.f32.partialorder %v634, 8.507059e+37
    %v636 = vand.u32 %v607, 2147483648
    %v637 = vor.u32 1.1754944e-38, %v636
    %v638 = vsel %vm635, %v637, %v633
    %v639 = vmul.f32 1.0, %v638
    %v640 = vrcp.pop %v608
    %v641 = vmul.f32 %v608, %v640
    %v642 = vsub.f32 1.0, %v641
    %v643 = vmul.f32 %v640, %v642
    %v644 = vadd.f32 %v640, %v643
    %vm645 = vweird.f32 %v608
    %vm646 = vweird.f32 %v640
    %vm647 = vmor %vm645, %vm646
    %v648 = vsel %vm647, %v640, %v644
    %v649 = vand.u32 2147483647, %v608
    %vm650 = vcmp.eq.f32.partialorder %v649, 8.507059e+37
    %v651 = vand.u32 %v608, 2147483648
    %v652 = vor.u32 1.1754944e-38, %v651
    %v653 = vsel %vm650, %v652, %v648
    %v654 = vmul.f32 1.0, %v653
    %v655 = vrcp.pop %v609
    %v656 = vmul.f32 %v609, %v655
    %v657 = vsub.f32 1.0, %v656
    %v658 = vmul.f32 %v655, %v657
    %v659 = vadd.f32 %v655, %v658
    %vm660 = vweird.f32 %v609
    %vm661 = vweird.f32 %v655
    %vm662 = vmor %vm660, %vm661
    %v663 = vsel %vm662, %v655, %v659
    %v664 = vand.u32 2147483647, %v609
    %vm665 = vcmp.eq.f32.partialorder %v664, 8.507059e+37
    %v666 = vand.u32 %v609, 2147483648
    %v667 = vor.u32 1.1754944e-38, %v666
    %v668 = vsel %vm665, %v667, %v663
    %v669 = vmul.f32 1.0, %v668
    %v670 = vmul.f32 %v513, %v624
    %v671 = vmul.f32 %v539, %v639
    %v672 = vmul.f32 %v565, %v654
    %v673 = vmul.f32 %v591, %v669
    %674 = vst [vmem:[#allocation7] sm:$0xff] %v670
    %675 = vst [vmem:[#allocation7 + $0x8] sm:$0xff] %v671
    %676 = vst [vmem:[#allocation7 + $0x10] sm:$0xff] %v672
    %677 = vst [vmem:[#allocation7 + $0x18] sm:$0xff] %v673
    // Predicated region
    $region30: #{tpu_custom_call.1} parent=1 // pred_check
      _
    $region31: #{tpu_custom_call.1} parent=1 // pred_check_branch
      %679 = sbr.rel (0) target = $region33
    $region32: #{tpu_custom_call.1} parent=1 // pred_region
      %681 = vsyncadd [#allocation4], 0
      %s683 = sshll.u32 [#allocation7], 4
      %s684 = int_to_ptr.vmem [resolvable:$true] %s683
      %s685 = sshll.u32 %s5, 4
      %s686 = int_to_ptr.hbm [resolvable:$true] %s685
      %688 = dma.vmem_to_hbm [thread:$0]  %s684, 512, %s686, [#allocation4]
    $region33: #{tpu_custom_call.1} parent=1 // pred_fallthru
      _
    // Predicated region
    $region34: #{tpu_custom_call.1} parent=1 // pred_check
      _
    $region35: #{tpu_custom_call.1} parent=1 // pred_check_branch
      %690 = sbr.rel (0) target = $region37
    $region36: #{tpu_custom_call.1} parent=1 // pred_region
      %692 = dma.done [#allocation4], 512
    $region37: #{tpu_custom_call.1} parent=1 // pred_fallthru
      _
    %693 = vsyncpa [#allocation3], 1
    %694 = vsyncpa [#allocation6], 1
    %695 = vsyncpa [#allocation4], 1

</llo_original>
